<compile_context>
chip_gen: v7x
topology: tpu7x:2x2x1
jax: 0.10.0
libtpu: 0.0.40
codegen_flags: <defaults>
</compile_context>

<pallas_src>
import jax
import jax.numpy as jnp
from jax.experimental import pallas as pl
from jax.experimental.pallas import tpu as pltpu  # noqa: F401  (TPU backend)


def _model_kernel(y_ref, o_ref):
    # y_ref: (B, N) flattened input (full-array block, no grid)
    # o_ref: (B, 1) row sums
    y = y_ref[...].astype(jnp.float32)
    # Elementwise chain on the ORIGINAL data only; the doubled (concat) sum is
    # recovered with a single 2.0 * scale.
    z = jnp.tanh(jnp.sin(jnp.tanh(y)))
    o_ref[...] = (2.0 * jnp.sum(z, axis=1, keepdims=True)).astype(o_ref.dtype)


def model_forward(x):
    b = x.shape[0]
    y = x.reshape(b, -1)                                        # (B, N), free view
    n = y.shape[1]

    # TODO(synk): if B*N is ever scaled into the multi-vreg regime, switch to a
    # tiled grid: B axis "parallel" (engages both TCs on v7x), N as the trailing
    # "arbitrary" reduction axis with a VMEM (tb, 1) f32 accumulator
    # (pl.when init at k==0, 2x-scale finalize at last k); use tiles of at
    # least (256-512 rows, >=2048 lanes) sized against 32 MiB scoped VMEM on
    # v7x (16 MiB on v5e), and bf16 transcendentals only on v6e/v7x.
    return pl.pallas_call(
        _model_kernel,
        out_shape=jax.ShapeDtypeStruct((b, 1), jnp.float32),
        in_specs=[pl.BlockSpec((b, n), lambda: (0, 0))],
        out_specs=pl.BlockSpec((b, 1), lambda: (0, 0)),
    )(y)


if __name__ == "__main__":
    key = jax.random.PRNGKey(0)
    x = jax.random.normal(key, (2, 3, 4), dtype=jnp.float32)

    out = model_forward(x)
    jax.block_until_ready(out)

    # Reference in plain JAX, following the PyTorch module literally
    # (including the concat).
    y = x.reshape(2, -1)
    y_cat = jnp.concatenate([y, y], axis=1)
    ref = jnp.sum(jnp.tanh(jnp.sin(jnp.tanh(y_cat))), axis=1, keepdims=True)

    assert out.shape == (2, 1)
    assert jnp.allclose(out, ref, atol=1e-5, rtol=1e-5)

    print("KERNEL_OK")
</pallas_src>

<mosaic_0001>
module attributes {stable_mosaic.version = 11 : i64} {
  func.func @_model_kernel(%arg0: memref<2x12xf32, #tpu.memory_space<vmem>>, %arg1: memref<2x1xf32, #tpu.memory_space<vmem>>) attributes {dimension_semantics = [], scalar_prefetch = 0 : i64, scratch_operands = 0 : i64, tpu.core_type = #tpu.core_type<tc>} {
    %c0 = arith.constant 0 : index
    %c0_0 = arith.constant 0 : index
    %0 = vector.load %arg0[%c0, %c0_0] : memref<2x12xf32, #tpu.memory_space<vmem>>, vector<2x12xf32>
    %1 = math.tanh %0 : vector<2x12xf32>
    %2 = math.sin %1 : vector<2x12xf32>
    %3 = math.tanh %2 : vector<2x12xf32>
    %cst = arith.constant dense<0.000000e+00> : vector<2xf32>
    %4 = vector.multi_reduction <add>, %3, %cst [1] : vector<2x12xf32> to vector<2xf32>
    %5 = vector.shape_cast %4 : vector<2xf32> to vector<2x1xf32>
    %cst_1 = arith.constant 2.000000e+00 : f32
    %6 = vector.broadcast %cst_1 : f32 to vector<2x1xf32>
    %7 = arith.mulf %6, %5 : vector<2x1xf32>
    %c0_2 = arith.constant 0 : index
    %c0_3 = arith.constant 0 : index
    %8 = vector.load %arg1[%c0_2, %c0_3] : memref<2x1xf32, #tpu.memory_space<vmem>>, vector<2x1xf32>
    tpu.vector_store %arg1[%c0_2, %c0_3], %7 {strides = array<i32>} : memref<2x1xf32, #tpu.memory_space<vmem>>, vector<2x1xf32>,
    return
  }
}

</mosaic_0001>

<llo_original>
// kernel: tpu_custom_call.1
$region0: #{tpu_custom_call.1}
  #allocation0 [shape = 'u32[]', space=smem, size = 0x4, offset = 0x4, fixed_abs, tag = 'smem constant byte address 0x4 - core index']
  #allocation1 [shape = 'u32[144,128]{1,0:T(1,128)}', space=vmem, size = 0x12000, scoped, tag = 'internal scratch']
  %s0 = inlined_call_operand.hbm [shape: f32[2,12], index: 0, kind: input, shape index: {}]
  %s1 = inlined_call_operand.vmem [shape: f32[2,1], index: 1, kind: output, shape index: {}]
  %s2 = sld [smem:[#allocation0]]
  $region18: #{tpu_custom_call.1} parent=0
    _
  %s4 = ssub.s32 1, %s2
  %s5 = scalar_select 0, %s4, %s2
  $region1: #{tpu_custom_call.1} parent=0
    #allocation2 [shape = 'u8[1024]{0}', space=vmem, size = 0x400, scoped, tag = 'input window, operand 0, single buffered']
    #allocation3 [shape = 's32[1]{0}', space=sflag, size = 0x4, scoped, tag = 'scoped memory for tpu_custom_call.1']
    %6 = vsyncpa [#allocation3], 0
    // Predicated region
    $region2: #{tpu_custom_call.1} parent=1 // pred_check
      _
    $region3: #{tpu_custom_call.1} parent=1 // pred_check_branch
      %8 = sbr.rel (0) target = $region5
    $region4: #{tpu_custom_call.1} parent=1 // pred_region
      %s10 = ssub.s32 32, 32
      %11 = vsyncadd [#allocation3], %s10
      %s13 = sshll.u32 [#allocation2], 4
      %s14 = int_to_ptr.vmem [resolvable:$true] %s13
      %16 = dma.hbm_to_vmem [thread:$0]  %s0, 32, %s14, [#allocation3]
    $region5: #{tpu_custom_call.1} parent=1 // pred_fallthru
      _
    // Predicated region
    $region6: #{tpu_custom_call.1} parent=1 // pred_check
      _
    $region7: #{tpu_custom_call.1} parent=1 // pred_check_branch
      %18 = sbr.rel (0) target = $region9
    $region8: #{tpu_custom_call.1} parent=1 // pred_region
      %19 = dma.done [#allocation3], 32
    $region9: #{tpu_custom_call.1} parent=1 // pred_fallthru
      _
    %v20 = vld [vmem:[#allocation2] sm:$0x3]
    %v21 = vtanh.pop %v20
    %v22 = vand.u32 2147483647, %v21
    %vm23 = vcmp.le.f32.partialorder %v22, 0.7853982
    %vm24 = vcmp.lt.s32.totalorder %v21, 0
    %v25 = vand.u32 %v21, 2139095040
    %v26 = vshrl.u32 %v25, 23
    %v27 = vsub.s32 %v26, 127
    %v28 = vand.u32 2147483647, %v21
    %v29 = vand.u32 %v28, 8388607
    %v30 = vor.u32 %v29, 8388608
    %v31 = vsub.s32 0, %v30
    %v32 = vadd.s32 %v27, 1
    %vm33 = vcmp.gt.s32.totalorder %v32, 0
    %v34 = vsel %vm33, %v32, 0
    %v35 = vshrl.u32 %v34, 5
    %v36 = vand.u32 %v34, 31
    %v37 = vsub.s32 32, %v36
    %v38 = vshrl.u32 683565275, %v37
    %v39 = vshll.u32 683565275, %v36
    %v40 = vshrl.u32 2475754826, %v37
    %v41 = vor.u32 %v39, %v40
    %v42 = vshll.u32 2475754826, %v36
    %v43 = vshrl.u32 2131351028, %v37
    %v44 = vor.u32 %v42, %v43
    %v45 = vshll.u32 2131351028, %v36
    %v46 = vshrl.u32 2102212464, %v37
    %v47 = vor.u32 %v45, %v46
    %v48 = vshll.u32 2102212464, %v36
    %v49 = vshrl.u32 920167782, %v37
    %v50 = vor.u32 %v48, %v49
    %v51 = vshll.u32 920167782, %v36
    %v52 = vshrl.u32 1326507024, %v37
    %v53 = vor.u32 %v51, %v52
    %vm54 = vcmp.lt.s32.totalorder %v35, 1
    %vm55 = vcmp.lt.s32.totalorder %v35, 2
    %vm56 = vcmp.lt.s32.totalorder %v35, 3
    %vm57 = vcmp.lt.s32.totalorder %v35, 4
    %v58 = vsel %vm54, %v38, %v41
    %v59 = vsel %vm57, %v47, 2102212464
    %v60 = vsel %vm56, %v44, %v59
    %v61 = vsel %vm55, %v58, %v60
    %v62 = vsel %vm54, %v41, %v44
    %v63 = vsel %vm57, %v50, 920167782
    %v64 = vsel %vm56, %v47, %v63
    %v65 = vsel %vm55, %v62, %v64
    %v66 = vsel %vm54, %v44, %v47
    %v67 = vsel %vm57, %v53, 1326507024
    %v68 = vsel %vm56, %v50, %v67
    %v69 = vsel %vm55, %v66, %v68
    %v70 = vshll.u32 %v30, 8
    %v71 = vmul.u32.u64.compose %v70, %v69
    %v72 = vextract.low.u32 %v71
    %v73 = vextract.high.u32 %v71
    %v74 = vmul.u32.u64.compose %v70, %v65
    %v75 = vextract.low.u32 %v74
    %v76 = vextract.high.u32 %v74
    %v77 = vmul.u32 %v70, %v61
    %v78 = vadd.s32 %v73, %v75
    %vm79 = vc.u32 %v73, %v75
    %v80 = vadd.s32 %v76, 1
    %v81 = vsel %vm79, %v80, %v76
    %v82 = vadd.s32 %v77, %v81
    %v83 = vadd.s32 %v82, 536870912
    %v84 = vshrl.u32 %v83, 30
    %v85 = vshll.u32 %v84, 30
    %v86 = vsub.s32 %v82, %v85
    %vm87 = vcmp.lt.s32.totalorder %v86, 0
    %v88 = vsub.s32 0, %v86
    %v89 = vsel %vm87, %v88, %v86
    %v90 = vclz %v89
    %v91 = vsub.s32 %v90, 2
    %vm92 = vcmp.gt.s32.totalorder 0, %v91
    %v93 = vsel %vm92, 0, %v91
    %v94 = vsub.s32 32, %v93
    %v95 = vshll.u32 %v86, %v93
    %v96 = vshrl.u32 %v78, %v94
    %v97 = vor.u32 %v95, %v96
    %v98 = vsub.s32 4294967266, %v93
    %v99 = vadd.s32 %v98, 127
    %v100 = vshll.u32 %v99, 23
    %v101 = vor.u32 4788187, %v100
    %v102 = vand.u32 2147483647, %v101
    %v104 = vcvt.s32.f32 %v97
    %v105 = vmul.f32 %v104, %v102
    %v106 = vxor.u32 %v105, 2147483648
    %v107 = vsel %vm24, %v106, %v105
    %v108 = vsub.s32 4, %v84
    %v109 = vsel %vm24, %v108, %v84
    %v110 = vsel %vm23, %v21, %v107
    %v111 = vsel %vm23, 0, %v109
    %v112 = vcosq.f32.pop %v110
    %v113 = vsinq.f32.pop %v110
    %vm114 = vweird.f32 %v21
    %v115 = vadd.s32 %v111, 3
    %v116 = vand.u32 %v115, 3
    %vm117 = vcmp.lt.s32.totalorder %v116, 2
    %vm118 = vcmp.eq.s32.totalorder %v116, 0
    %v119 = vxor.u32 %v113, 2147483648
    %v120 = vsel %vm118, %v112, %v119
    %vm121 = vcmp.eq.s32.totalorder %v116, 2
    %v122 = vxor.u32 %v112, 2147483648
    %v123 = vsel %vm121, %v122, %v113
    %v124 = vsel %vm117, %v120, %v123
    %v125 = vsel %vm114, nan, %v124
    %v126 = vtanh.pop %v125
    %vm127 = vcmask 91136
    %v128 = vsel %vm127, %v126, 0.0
    %129 = vadd.xlane.f32.xlu0 %v128
    %v130 = vpop.xlane.xlu0 %129
    %v131 = vmul.f32 %v130, 2.0
    %vm132 = vcmask 1024
    %133 = vst.msk [vmem:[%s1] sm:$0x3] %vm132, %v131
    // Predicated region
    $region10: #{tpu_custom_call.1} parent=1 // pred_check
      _
    $region11: #{tpu_custom_call.1} parent=1 // pred_check_branch
      %135 = sbr.rel (0) target = $region13
    $region12: #{tpu_custom_call.1} parent=1 // pred_region
      _
    $region13: #{tpu_custom_call.1} parent=1 // pred_fallthru
      _
    // Predicated region
    $region14: #{tpu_custom_call.1} parent=1 // pred_check
      _
    $region15: #{tpu_custom_call.1} parent=1 // pred_check_branch
      %137 = sbr.rel (0) target = $region17
    $region16: #{tpu_custom_call.1} parent=1 // pred_region
      _
    $region17: #{tpu_custom_call.1} parent=1 // pred_fallthru
      _
    %138 = vsyncpa [#allocation3], 1

</llo_original>
